<compile_context>
chip_gen: v5e
topology: v5e:2x2
jax: 0.10.0
libtpu: 0.0.40
codegen_flags: <defaults>
</compile_context>

<pallas_src>
import jax
import jax.numpy as jnp
from jax import lax
from jax.experimental import pallas as pl
from jax.experimental.pallas import tpu as pltpu


VMEM_LIMIT_BYTES = 48 * 1024 * 1024   # explicit scoped-VMEM budget (safe on v5e/v6e/v7x)


# ----------------------------------------------------------------------------
# Pallas kernel 1: fused multi-layer NBFNet-style relational conv (per batch).
# ----------------------------------------------------------------------------
def _gnn_stack_kernel(adjF_ref, x0_ref, rel_ref, w_ref, b_ref, g_ref, beta_ref, o_ref):
    # adjF_ref : [N, NR*N] bf16  relation-typed adjacency, flattened [dst, r*N + src]
    # x0_ref   : [1, N, D] f32   boundary condition (== initial node state)
    # rel_ref  : [1, L, NR, D]   per-layer relation embeddings (DistMult factors)
    # w_ref    : [L, 2D, D]      update Linear(cat([x, agg])) weights
    # b/g/beta : [L, D]          bias / LayerNorm gamma / LayerNorm beta
    n_layers = rel_ref.shape[1]
    nr = rel_ref.shape[2]
    n = x0_ref.shape[1]
    d = x0_ref.shape[2]

    adjF = adjF_ref[...]                    # [N, NR*N] bf16 — loaded once, reused L times
    boundary = x0_ref[0]                    # [N, D]
    x = boundary

    for l in range(n_layers):               # small static L -> unrolled
        rel = rel_ref[0, l]                 # [NR, D]
        # DistMult message pass fused into one MXU matmul:
        #   sum_r (A_r @ x) * rel_r == A_flat @ stack_r(x * rel_r)
        xr = (rel[:, None, :] * x[None, :, :]).reshape(nr * n, d)          # [NR*N, D]
        agg = boundary + jnp.dot(adjF, xr.astype(jnp.bfloat16),
                                 preferred_element_type=jnp.float32)       # [N, D] f32

        # Linear(cat([x, agg])) as two matmuls (no lane concat), f32 accumulate.
        z = (jnp.dot(x, w_ref[l, 0:d, :], preferred_element_type=jnp.float32)
             + jnp.dot(agg, w_ref[l, d:2 * d, :], preferred_element_type=jnp.float32)
             + b_ref[l][None, :])

        # LayerNorm over feature dim (torch defaults: eps=1e-5, biased variance).
        mean = jnp.mean(z, axis=-1, keepdims=True)
        var = jnp.mean((z - mean) ** 2, axis=-1, keepdims=True)
        zn = (z - mean) * lax.rsqrt(var + 1e-5)
        zn = zn * g_ref[l][None, :] + beta_ref[l][None, :]

        x = jnp.maximum(zn, 0.0) + x        # ReLU + residual short-cut

    o_ref[0] = x


def gnn_stack(adjF, x0, rel_stack, w, b, g, beta):
    """Run all L GNN layers of one NBFNet model in a single pallas_call.

    adjF      : [N, NR*N] bf16 (grid-invariant, flattened relation adjacency)
    x0        : [B, N, D]      boundary condition / initial state
    rel_stack : [1 or B, L, NR, D] per-layer relation embeddings
    w         : [L, 2D, D]; b, g, beta : [L, D]
    """
    B, N, D = x0.shape
    Bx, L, NR, _ = rel_stack.shape
    rel_map = (lambda i: (0, 0, 0, 0)) if Bx == 1 else (lambda i: (i, 0, 0, 0))
    # TODO(synk): for realistic graph sizes, add a src-dim reduction grid axis for
    # adjF (v7x 64 MiB VMEM) and single-buffer it via pipeline_mode=pl.Buffered(1).
    return pl.pallas_call(
        _gnn_stack_kernel,
        out_shape=jax.ShapeDtypeStruct((B, N, D), jnp.float32),
        grid=(B,),
        in_specs=[
            pl.BlockSpec((N, adjF.shape[1]), lambda i: (0, 0)),
            pl.BlockSpec((1, N, D), lambda i: (i, 0, 0)),
            pl.BlockSpec((1, L, NR, D), rel_map),
            pl.BlockSpec((L, 2 * D, D), lambda i: (0, 0, 0)),
            pl.BlockSpec((L, D), lambda i: (0, 0)),
            pl.BlockSpec((L, D), lambda i: (0, 0)),
            pl.BlockSpec((L, D), lambda i: (0, 0)),
        ],
        out_specs=pl.BlockSpec((1, N, D), lambda i: (i, 0, 0)),
        compiler_params=pltpu.CompilerParams(
            dimension_semantics=("parallel",),
            vmem_limit_bytes=VMEM_LIMIT_BYTES),
    )(adjF, x0, rel_stack, w, b, g, beta)


# ----------------------------------------------------------------------------
# Pallas kernel 2: scoring MLP  Linear(2D,2D) -> ReLU -> Linear(2D,1),
# fed with the tail node states and the query embedding separately
# (W1 split into two [D, 2D] halves -> no [B, E, 2D] concat is ever built).
# ----------------------------------------------------------------------------
def _score_kernel(xt_ref, q_ref, w1x_ref, w1q_ref, b1_ref, w2_ref, b2_ref, o_ref):
    xt = xt_ref[0]                                                    # [Nneg, D]
    q = q_ref[0]                                                      # [1, D]
    h = (jnp.dot(xt, w1x_ref[...], preferred_element_type=jnp.float32)
         + jnp.dot(q, w1q_ref[...], preferred_element_type=jnp.float32)   # bcast rows
         + b1_ref[0][None, :])                                        # [Nneg, 2D]
    h = jnp.maximum(h, 0.0)
    s = jnp.sum(h * w2_ref[0][None, :], axis=-1) + b2_ref[0, 0]       # [Nneg]
    o_ref[0, 0, :] = s


def score_mlp(x_tail, query, w1x, w1q, b1, w2, b2):
    B, Nneg, D = x_tail.shape
    F2 = w1x.shape[1]
    q3 = query.reshape(B, 1, D)
    out = pl.pallas_call(
        _score_kernel,
        out_shape=jax.ShapeDtypeStruct((B, 1, Nneg), jnp.float32),
        grid=(B,),
        in_specs=[
            pl.BlockSpec((1, Nneg, D), lambda i: (i, 0, 0)),
            pl.BlockSpec((1, 1, D), lambda i: (i, 0, 0)),
            pl.BlockSpec((D, F2), lambda i: (0, 0)),
            pl.BlockSpec((D, F2), lambda i: (0, 0)),
            pl.BlockSpec((1, F2), lambda i: (0, 0)),
            pl.BlockSpec((1, F2), lambda i: (0, 0)),
            pl.BlockSpec((1, 1), lambda i: (0, 0)),
        ],
        out_specs=pl.BlockSpec((1, 1, Nneg), lambda i: (i, 0, 0)),
        compiler_params=pltpu.CompilerParams(
            dimension_semantics=("parallel",),
            vmem_limit_bytes=VMEM_LIMIT_BYTES),
    )(x_tail, q3, w1x, w1q, b1, w2, b2)
    return out[:, 0, :]                                               # [B, Nneg]


# ----------------------------------------------------------------------------
# Relation model (RelNBFNet): message passing over the relation graph.
# ----------------------------------------------------------------------------
def relation_model_forward(p, rel_adjF, query_rels, num_rel_nodes):
    B = query_rels.shape[0]
    R = num_rel_nodes
    D = p["w"].shape[2]
    # boundary: all-ones query vector scattered onto the query-relation node.
    boundary = jnp.broadcast_to(
        jax.nn.one_hot(query_rels, R, dtype=jnp.float32)[:, :, None], (B, R, D))
    rel_stack = p["rel_emb"][None]          # [1, L, M, D] -- shared across batch
    return gnn_stack(rel_adjF, boundary, rel_stack,
                     p["w"], p["b"], p["g"], p["beta"])               # [B, R, D]


# ----------------------------------------------------------------------------
# Entity model (EntityNBFNet): message passing over the entity graph + scoring.
# ----------------------------------------------------------------------------
def entity_model_forward(p, ent_adjF, rel_reps, batch, num_entities):
    B, Nneg, _ = batch.shape
    E = num_entities
    D = rel_reps.shape[-1]
    h_index = batch[..., 0]
    t_index = batch[..., 1]
    r_index = batch[..., 2]
    # TODO(synk): negative_sample_to_tail conversion omitted; batch is assumed to
    # already be in tail-prediction mode (shared head/relation per row).
    h0 = h_index[:, 0]
    r0 = r_index[:, 0]
    query = rel_reps[jnp.arange(B), r0]                               # [B, D]
    boundary = (jax.nn.one_hot(h0, E, dtype=jnp.float32)[:, :, None]
                * query[:, None, :])                                  # [B, E, D]

    # Per-layer projection of relation representations (Linear-ReLU-Linear):
    # tiny matmuls, kept in plain JAX and stacked so the fused kernel indexes by layer.
    rels = [jnp.maximum(rel_reps @ lp["pw1"] + lp["pb1"], 0.0) @ lp["pw2"] + lp["pb2"]
            for lp in p["proj"]]
    rel_stack = jnp.stack(rels, axis=1)                               # [B, L, R, D]

    x = gnn_stack(ent_adjF, boundary, rel_stack,
                  p["w"], p["b"], p["g"], p["beta"])                  # [B, E, D]

    # Gather only the Nneg tail rows (no [B, E, 2D] concat, no E-wide query bcast).
    idx = jnp.broadcast_to(t_index[..., None], (B, Nneg, D))
    x_tail = jnp.take_along_axis(x, idx, axis=1)                      # [B, Nneg, D]
    mlp = p["mlp"]
    return score_mlp(x_tail, query, mlp["w1x"], mlp["w1q"],
                     mlp["b1"], mlp["w2"], mlp["b2"])


def ultra_forward(params, data, batch):
    query_rels = batch[:, 0, 2]                                       # [B]
    rel_reps = relation_model_forward(params["rel"], data["rel_adjF"],
                                      query_rels, data["num_relations"])
    score = entity_model_forward(params["ent"], data["ent_adjF"],
                                 rel_reps, batch, data["num_entities"])
    return score                                                      # [B, num_neg + 1]


# ----------------------------------------------------------------------------
# Deterministic parameter / data construction.
# ----------------------------------------------------------------------------
def init_params(key, D, M, L_rel, L_ent):
    def nrm(k, shape, scale=0.1):
        return scale * jax.random.normal(k, shape, dtype=jnp.float32)

    keys = iter(jax.random.split(key, 64))
    rel = dict(
        rel_emb=nrm(next(keys), (L_rel, M, D)),
        w=nrm(next(keys), (L_rel, 2 * D, D)),
        b=jnp.zeros((L_rel, D), jnp.float32),
        g=jnp.ones((L_rel, D), jnp.float32),
        beta=jnp.zeros((L_rel, D), jnp.float32),
    )
    proj = []
    for _ in range(L_ent):
        proj.append(dict(
            pw1=nrm(next(keys), (D, D)), pb1=jnp.zeros((D,), jnp.float32),
            pw2=nrm(next(keys), (D, D)), pb2=jnp.zeros((D,), jnp.float32)))
    F2 = 2 * D
    ent = dict(
        proj=proj,
        w=nrm(next(keys), (L_ent, 2 * D, D)),
        b=jnp.zeros((L_ent, D), jnp.float32),
        g=jnp.ones((L_ent, D), jnp.float32),
        beta=jnp.zeros((L_ent, D), jnp.float32),
        mlp=dict(
            w1x=nrm(next(keys), (D, F2)),        # rows of W1 acting on x
            w1q=nrm(next(keys), (D, F2)),        # rows of W1 acting on query
            b1=jnp.zeros((1, F2), jnp.float32),
            w2=nrm(next(keys), (1, F2)),         # stored pre-transposed: [1, 2D]
            b2=jnp.zeros((1, 1), jnp.float32),
        ))
    return dict(rel=rel, ent=ent)


def flatten_adj(adj):
    """[NR, src, dst] dense relation-typed adjacency -> [dst, NR*src] bf16."""
    nr, n, _ = adj.shape
    return jnp.transpose(adj, (2, 0, 1)).reshape(n, nr * n).astype(jnp.bfloat16)


if __name__ == "__main__":
    B, NNEG = 2, 4          # batch of queries, (1 positive + negatives) per query
    E, R, M = 16, 8, 4      # entities, relation types, meta-relations (h2h/h2t/t2h/t2t)
    D = 128                 # hidden dim (lane-dense: one full 128-lane tile)
    L_REL, L_ENT = 2, 2     # GNN layers per model

    root = jax.random.PRNGKey(0)
    k_params, k_rg, k_eg, k_h, k_t, k_r = jax.random.split(root, 6)

    params = init_params(k_params, D, M, L_REL, L_ENT)

    # Dense relation graph [M, R, R] and entity graph [R, E, E] (layout [r, src, dst]).
    # Flattened to [dst, r*src] bf16 so the per-layer message pass is one MXU matmul.
    rel_adj = jax.random.bernoulli(k_rg, 0.3, (M, R, R)).astype(jnp.float32)
    ent_adj = jax.random.bernoulli(k_eg, 0.3, (R, E, E)).astype(jnp.float32)
    data = dict(rel_adjF=flatten_adj(rel_adj), ent_adjF=flatten_adj(ent_adj),
                num_relations=R, num_entities=E)

    # batch: [B, NNEG, 3] triples (head, tail, relation); head/relation shared per row.
    h = jnp.broadcast_to(jax.random.randint(k_h, (B, 1), 0, E), (B, NNEG))
    t = jax.random.randint(k_t, (B, NNEG), 0, E)
    r = jnp.broadcast_to(jax.random.randint(k_r, (B, 1), 0, R), (B, NNEG))
    batch = jnp.stack([h, t, r], axis=-1).astype(jnp.int32)

    score = ultra_forward(params, data, batch)
    score = jax.block_until_ready(score)
    assert score.shape == (B, NNEG) and score.dtype == jnp.float32
    assert bool(jnp.all(jnp.isfinite(score)))
    print("KERNEL_OK")
</pallas_src>

<mosaic_0001>
module attributes {stable_mosaic.version = 11 : i64} {
  func.func @_gnn_stack_kernel(%arg0: i32, %arg1: memref<8x32xbf16, #tpu.memory_space<vmem>>, %arg2: memref<1x8x128xf32, #tpu.memory_space<vmem>>, %arg3: memref<1x2x4x128xf32, #tpu.memory_space<vmem>>, %arg4: memref<2x256x128xf32, #tpu.memory_space<vmem>>, %arg5: memref<2x128xf32, #tpu.memory_space<vmem>>, %arg6: memref<2x128xf32, #tpu.memory_space<vmem>>, %arg7: memref<2x128xf32, #tpu.memory_space<vmem>>, %arg8: memref<1x8x128xf32, #tpu.memory_space<vmem>>) attributes {dimension_semantics = [#tpu.dimension_semantics<parallel>], iteration_bounds = array<i64: 2>, scalar_prefetch = 0 : i64, scratch_operands = 0 : i64, tpu.core_type = #tpu.core_type<tc>, window_params = [{pipeline_mode = #tpu.pipeline_mode<synchronous>, transform_indices = @transform_0, window_bounds = array<i64: 8, 32>}, {transform_indices = @transform_1, window_bounds = array<i64: 1, 8, 128>}, {pipeline_mode = #tpu.pipeline_mode<synchronous>, transform_indices = @transform_2, window_bounds = array<i64: 1, 2, 4, 128>}, {pipeline_mode = #tpu.pipeline_mode<synchronous>, transform_indices = @transform_3, window_bounds = array<i64: 2, 256, 128>}, {pipeline_mode = #tpu.pipeline_mode<synchronous>, transform_indices = @transform_4, window_bounds = array<i64: 2, 128>}, {pipeline_mode = #tpu.pipeline_mode<synchronous>, transform_indices = @transform_5, window_bounds = array<i64: 2, 128>}, {pipeline_mode = #tpu.pipeline_mode<synchronous>, transform_indices = @transform_6, window_bounds = array<i64: 2, 128>}, {transform_indices = @transform_7, window_bounds = array<i64: 1, 8, 128>}]} {
    %c0 = arith.constant 0 : index
    %c0_0 = arith.constant 0 : index
    %0 = vector.load %arg1[%c0, %c0_0] : memref<8x32xbf16, #tpu.memory_space<vmem>>, vector<8x32xbf16>
    %c0_1 = arith.constant 0 : index
    %c0_2 = arith.constant 0 : index
    %c0_3 = arith.constant 0 : index
    %1 = vector.load %arg2[%c0_1, %c0_2, %c0_3] : memref<1x8x128xf32, #tpu.memory_space<vmem>>, vector<1x8x128xf32>
    %2 = vector.shape_cast %1 : vector<1x8x128xf32> to vector<8x128xf32>
    %c0_4 = arith.constant 0 : index
    %c0_5 = arith.constant 0 : index
    %c0_6 = arith.constant 0 : index
    %c0_7 = arith.constant 0 : index
    %3 = vector.load %arg3[%c0_4, %c0_5, %c0_6, %c0_7] : memref<1x2x4x128xf32, #tpu.memory_space<vmem>>, vector<1x1x4x128xf32>
    %4 = vector.shape_cast %3 : vector<1x1x4x128xf32> to vector<4x128xf32>
    %5 = vector.shape_cast %4 : vector<4x128xf32> to vector<4x1x128xf32>
    %6 = vector.shape_cast %2 : vector<8x128xf32> to vector<1x8x128xf32>
    %7 = vector.broadcast %5 : vector<4x1x128xf32> to vector<4x8x128xf32>
    %8 = vector.broadcast %6 : vector<1x8x128xf32> to vector<4x8x128xf32>
    %9 = arith.mulf %7, %8 : vector<4x8x128xf32>
    %10 = vector.shape_cast %9 : vector<4x8x128xf32> to vector<32x128xf32>
    %11 = arith.truncf %10 : vector<32x128xf32> to vector<32x128xbf16>
    %cst = arith.constant dense<0.000000e+00> : vector<8x128xf32>
    %12 = tpu.matmul %0, %11, %cst {dimension_numbers = #tpu.dot_dimension_numbers<[1], [0], [0], [1], [0, 0, 1, 1], [], []>} : vector<8x32xbf16>, vector<32x128xbf16>, vector<8x128xf32> -> vector<8x128xf32>
    %13 = arith.addf %2, %12 : vector<8x128xf32>
    %c0_8 = arith.constant 0 : index
    %c0_9 = arith.constant 0 : index
    %c0_10 = arith.constant 0 : index
    %14 = vector.load %arg4[%c0_8, %c0_9, %c0_10] : memref<2x256x128xf32, #tpu.memory_space<vmem>>, vector<1x128x128xf32>
    %15 = vector.shape_cast %14 : vector<1x128x128xf32> to vector<128x128xf32>
    %cst_11 = arith.constant dense<0.000000e+00> : vector<8x128xf32>
    %16 = tpu.matmul %2, %15, %cst_11 {dimension_numbers = #tpu.dot_dimension_numbers<[1], [0], [0], [1], [0, 0, 1, 1], [], []>} : vector<8x128xf32>, vector<128x128xf32>, vector<8x128xf32> -> vector<8x128xf32>
    %c0_12 = arith.constant 0 : index
    %c128 = arith.constant 128 : index
    %c0_13 = arith.constant 0 : index
    %17 = vector.load %arg4[%c0_12, %c128, %c0_13] : memref<2x256x128xf32, #tpu.memory_space<vmem>>, vector<1x128x128xf32>
    %18 = vector.shape_cast %17 : vector<1x128x128xf32> to vector<128x128xf32>
    %cst_14 = arith.constant dense<0.000000e+00> : vector<8x128xf32>
    %19 = tpu.matmul %13, %18, %cst_14 {dimension_numbers = #tpu.dot_dimension_numbers<[1], [0], [0], [1], [0, 0, 1, 1], [], []>} : vector<8x128xf32>, vector<128x128xf32>, vector<8x128xf32> -> vector<8x128xf32>
    %20 = arith.addf %16, %19 : vector<8x128xf32>
    %c0_15 = arith.constant 0 : index
    %c0_16 = arith.constant 0 : index
    %21 = vector.load %arg5[%c0_15, %c0_16] : memref<2x128xf32, #tpu.memory_space<vmem>>, vector<1x128xf32>
    %22 = vector.shape_cast %21 : vector<1x128xf32> to vector<128xf32>
    %23 = vector.shape_cast %22 : vector<128xf32> to vector<1x128xf32>
    %24 = vector.broadcast %23 : vector<1x128xf32> to vector<8x128xf32>
    %25 = arith.addf %20, %24 : vector<8x128xf32>
    %cst_17 = arith.constant dense<0.000000e+00> : vector<8xf32>
    %26 = vector.multi_reduction <add>, %25, %cst_17 [1] : vector<8x128xf32> to vector<8xf32>
    %27 = vector.shape_cast %26 : vector<8xf32> to vector<8x1xf32>
    %cst_18 = arith.constant 1.280000e+02 : f32
    %28 = vector.broadcast %cst_18 : f32 to vector<8x1xf32>
    %29 = arith.divf %27, %28 : vector<8x1xf32>
    %30 = vector.broadcast %29 : vector<8x1xf32> to vector<8x128xf32>
    %31 = arith.subf %25, %30 : vector<8x128xf32>
    %32 = arith.mulf %31, %31 : vector<8x128xf32>
    %cst_19 = arith.constant dense<0.000000e+00> : vector<8xf32>
    %33 = vector.multi_reduction <add>, %32, %cst_19 [1] : vector<8x128xf32> to vector<8xf32>
    %34 = vector.shape_cast %33 : vector<8xf32> to vector<8x1xf32>
    %cst_20 = arith.constant 1.280000e+02 : f32
    %35 = vector.broadcast %cst_20 : f32 to vector<8x1xf32>
    %36 = arith.divf %34, %35 : vector<8x1xf32>
    %37 = vector.broadcast %29 : vector<8x1xf32> to vector<8x128xf32>
    %38 = arith.subf %25, %37 : vector<8x128xf32>
    %cst_21 = arith.constant 9.99999974E-6 : f32
    %39 = vector.broadcast %cst_21 : f32 to vector<8x1xf32>
    %40 = arith.addf %36, %39 : vector<8x1xf32>
    %41 = math.rsqrt %40 : vector<8x1xf32>
    %42 = vector.broadcast %41 : vector<8x1xf32> to vector<8x128xf32>
    %43 = arith.mulf %38, %42 : vector<8x128xf32>
    %c0_22 = arith.constant 0 : index
    %c0_23 = arith.constant 0 : index
    %44 = vector.load %arg6[%c0_22, %c0_23] : memref<2x128xf32, #tpu.memory_space<vmem>>, vector<1x128xf32>
    %45 = vector.shape_cast %44 : vector<1x128xf32> to vector<128xf32>
    %46 = vector.shape_cast %45 : vector<128xf32> to vector<1x128xf32>
    %47 = vector.broadcast %46 : vector<1x128xf32> to vector<8x128xf32>
    %48 = arith.mulf %43, %47 : vector<8x128xf32>
    %c0_24 = arith.constant 0 : index
    %c0_25 = arith.constant 0 : index
    %49 = vector.load %arg7[%c0_24, %c0_25] : memref<2x128xf32, #tpu.memory_space<vmem>>, vector<1x128xf32>
    %50 = vector.shape_cast %49 : vector<1x128xf32> to vector<128xf32>
    %51 = vector.shape_cast %50 : vector<128xf32> to vector<1x128xf32>
    %52 = vector.broadcast %51 : vector<1x128xf32> to vector<8x128xf32>
    %53 = arith.addf %48, %52 : vector<8x128xf32>
    %cst_26 = arith.constant 0.000000e+00 : f32
    %54 = vector.broadcast %cst_26 : f32 to vector<8x128xf32>
    %55 = arith.maximumf %53, %54 : vector<8x128xf32>
    %56 = arith.addf %55, %2 : vector<8x128xf32>
    %c0_27 = arith.constant 0 : index
    %c1 = arith.constant 1 : index
    %c0_28 = arith.constant 0 : index
    %c0_29 = arith.constant 0 : index
    %57 = vector.load %arg3[%c0_27, %c1, %c0_28, %c0_29] : memref<1x2x4x128xf32, #tpu.memory_space<vmem>>, vector<1x1x4x128xf32>
    %58 = vector.shape_cast %57 : vector<1x1x4x128xf32> to vector<4x128xf32>
    %59 = vector.shape_cast %58 : vector<4x128xf32> to vector<4x1x128xf32>
    %60 = vector.shape_cast %56 : vector<8x128xf32> to vector<1x8x128xf32>
    %61 = vector.broadcast %59 : vector<4x1x128xf32> to vector<4x8x128xf32>
    %62 = vector.broadcast %60 : vector<1x8x128xf32> to vector<4x8x128xf32>
    %63 = arith.mulf %61, %62 : vector<4x8x128xf32>
    %64 = vector.shape_cast %63 : vector<4x8x128xf32> to vector<32x128xf32>
    %65 = arith.truncf %64 : vector<32x128xf32> to vector<32x128xbf16>
    %cst_30 = arith.constant dense<0.000000e+00> : vector<8x128xf32>
    %66 = tpu.matmul %0, %65, %cst_30 {dimension_numbers = #tpu.dot_dimension_numbers<[1], [0], [0], [1], [0, 0, 1, 1], [], []>} : vector<8x32xbf16>, vector<32x128xbf16>, vector<8x128xf32> -> vector<8x128xf32>
    %67 = arith.addf %2, %66 : vector<8x128xf32>
    %c1_31 = arith.constant 1 : index
    %c0_32 = arith.constant 0 : index
    %c0_33 = arith.constant 0 : index
    %68 = vector.load %arg4[%c1_31, %c0_32, %c0_33] : memref<2x256x128xf32, #tpu.memory_space<vmem>>, vector<1x128x128xf32>
    %69 = vector.shape_cast %68 : vector<1x128x128xf32> to vector<128x128xf32>
    %cst_34 = arith.constant dense<0.000000e+00> : vector<8x128xf32>
    %70 = tpu.matmul %56, %69, %cst_34 {dimension_numbers = #tpu.dot_dimension_numbers<[1], [0], [0], [1], [0, 0, 1, 1], [], []>} : vector<8x128xf32>, vector<128x128xf32>, vector<8x128xf32> -> vector<8x128xf32>
    %c1_35 = arith.constant 1 : index
    %c128_36 = arith.constant 128 : index
    %c0_37 = arith.constant 0 : index
    %71 = vector.load %arg4[%c1_35, %c128_36, %c0_37] : memref<2x256x128xf32, #tpu.memory_space<vmem>>, vector<1x128x128xf32>
    %72 = vector.shape_cast %71 : vector<1x128x128xf32> to vector<128x128xf32>
    %cst_38 = arith.constant dense<0.000000e+00> : vector<8x128xf32>
    %73 = tpu.matmul %67, %72, %cst_38 {dimension_numbers = #tpu.dot_dimension_numbers<[1], [0], [0], [1], [0, 0, 1, 1], [], []>} : vector<8x128xf32>, vector<128x128xf32>, vector<8x128xf32> -> vector<8x128xf32>
    %74 = arith.addf %70, %73 : vector<8x128xf32>
    %c1_39 = arith.constant 1 : index
    %c0_40 = arith.constant 0 : index
    %75 = vector.load %arg5[%c1_39, %c0_40] : memref<2x128xf32, #tpu.memory_space<vmem>>, vector<1x128xf32>
    %76 = vector.shape_cast %75 : vector<1x128xf32> to vector<128xf32>
    %77 = vector.shape_cast %76 : vector<128xf32> to vector<1x128xf32>
    %78 = vector.broadcast %77 : vector<1x128xf32> to vector<8x128xf32>
    %79 = arith.addf %74, %78 : vector<8x128xf32>
    %cst_41 = arith.constant dense<0.000000e+00> : vector<8xf32>
    %80 = vector.multi_reduction <add>, %79, %cst_41 [1] : vector<8x128xf32> to vector<8xf32>
    %81 = vector.shape_cast %80 : vector<8xf32> to vector<8x1xf32>
    %cst_42 = arith.constant 1.280000e+02 : f32
    %82 = vector.broadcast %cst_42 : f32 to vector<8x1xf32>
    %83 = arith.divf %81, %82 : vector<8x1xf32>
    %84 = vector.broadcast %83 : vector<8x1xf32> to vector<8x128xf32>
    %85 = arith.subf %79, %84 : vector<8x128xf32>
    %86 = arith.mulf %85, %85 : vector<8x128xf32>
    %cst_43 = arith.constant dense<0.000000e+00> : vector<8xf32>
    %87 = vector.multi_reduction <add>, %86, %cst_43 [1] : vector<8x128xf32> to vector<8xf32>
    %88 = vector.shape_cast %87 : vector<8xf32> to vector<8x1xf32>
    %cst_44 = arith.constant 1.280000e+02 : f32
    %89 = vector.broadcast %cst_44 : f32 to vector<8x1xf32>
    %90 = arith.divf %88, %89 : vector<8x1xf32>
    %91 = vector.broadcast %83 : vector<8x1xf32> to vector<8x128xf32>
    %92 = arith.subf %79, %91 : vector<8x128xf32>
    %cst_45 = arith.constant 9.99999974E-6 : f32
    %93 = vector.broadcast %cst_45 : f32 to vector<8x1xf32>
    %94 = arith.addf %90, %93 : vector<8x1xf32>
    %95 = math.rsqrt %94 : vector<8x1xf32>
    %96 = vector.broadcast %95 : vector<8x1xf32> to vector<8x128xf32>
    %97 = arith.mulf %92, %96 : vector<8x128xf32>
    %c1_46 = arith.constant 1 : index
    %c0_47 = arith.constant 0 : index
    %98 = vector.load %arg6[%c1_46, %c0_47] : memref<2x128xf32, #tpu.memory_space<vmem>>, vector<1x128xf32>
    %99 = vector.shape_cast %98 : vector<1x128xf32> to vector<128xf32>
    %100 = vector.shape_cast %99 : vector<128xf32> to vector<1x128xf32>
    %101 = vector.broadcast %100 : vector<1x128xf32> to vector<8x128xf32>
    %102 = arith.mulf %97, %101 : vector<8x128xf32>
    %c1_48 = arith.constant 1 : index
    %c0_49 = arith.constant 0 : index
    %103 = vector.load %arg7[%c1_48, %c0_49] : memref<2x128xf32, #tpu.memory_space<vmem>>, vector<1x128xf32>
    %104 = vector.shape_cast %103 : vector<1x128xf32> to vector<128xf32>
    %105 = vector.shape_cast %104 : vector<128xf32> to vector<1x128xf32>
    %106 = vector.broadcast %105 : vector<1x128xf32> to vector<8x128xf32>
    %107 = arith.addf %102, %106 : vector<8x128xf32>
    %cst_50 = arith.constant 0.000000e+00 : f32
    %108 = vector.broadcast %cst_50 : f32 to vector<8x128xf32>
    %109 = arith.maximumf %107, %108 : vector<8x128xf32>
    %110 = arith.addf %109, %56 : vector<8x128xf32>
    %c0_51 = arith.constant 0 : index
    %c0_52 = arith.constant 0 : index
    %c0_53 = arith.constant 0 : index
    %111 = vector.load %arg8[%c0_51, %c0_52, %c0_53] : memref<1x8x128xf32, #tpu.memory_space<vmem>>, vector<1x8x128xf32>
    %112 = vector.shape_cast %111 : vector<1x8x128xf32> to vector<8x128xf32>
    %113 = vector.shape_cast %110 : vector<8x128xf32> to vector<1x8x128xf32>
    tpu.vector_store %arg8[%c0_51, %c0_52, %c0_53], %113 {strides = array<i32>} : memref<1x8x128xf32, #tpu.memory_space<vmem>>, vector<1x8x128xf32>,
    return
  }
  func.func @transform_0(%arg0: i32) -> (i32, i32) {
    %c0_i32 = arith.constant 0 : i32
    %c0_i32_0 = arith.constant 0 : i32
    %c0_i32_1 = arith.constant 0 : i32
    return %c0_i32, %c0_i32_0 : i32, i32
  }
  func.func @transform_1(%arg0: i32) -> (i32, i32, i32) {
    %c0_i32 = arith.constant 0 : i32
    %c0_i32_0 = arith.constant 0 : i32
    %c0_i32_1 = arith.constant 0 : i32
    return %arg0, %c0_i32, %c0_i32_0 : i32, i32, i32
  }
  func.func @transform_2(%arg0: i32) -> (i32, i32, i32, i32) {
    %c0_i32 = arith.constant 0 : i32
    %c0_i32_0 = arith.constant 0 : i32
    %c0_i32_1 = arith.constant 0 : i32
    %c0_i32_2 = arith.constant 0 : i32
    %c0_i32_3 = arith.constant 0 : i32
    return %c0_i32, %c0_i32_0, %c0_i32_1, %c0_i32_2 : i32, i32, i32, i32
  }
  func.func @transform_3(%arg0: i32) -> (i32, i32, i32) {
    %c0_i32 = arith.constant 0 : i32
    %c0_i32_0 = arith.constant 0 : i32
    %c0_i32_1 = arith.constant 0 : i32
    %c0_i32_2 = arith.constant 0 : i32
    return %c0_i32, %c0_i32_0, %c0_i32_1 : i32, i32, i32
  }
  func.func @transform_4(%arg0: i32) -> (i32, i32) {
    %c0_i32 = arith.constant 0 : i32
    %c0_i32_0 = arith.constant 0 : i32
    %c0_i32_1 = arith.constant 0 : i32
    return %c0_i32, %c0_i32_0 : i32, i32
  }
  func.func @transform_5(%arg0: i32) -> (i32, i32) {
    %c0_i32 = arith.constant 0 : i32
    %c0_i32_0 = arith.constant 0 : i32
    %c0_i32_1 = arith.constant 0 : i32
    return %c0_i32, %c0_i32_0 : i32, i32
  }
  func.func @transform_6(%arg0: i32) -> (i32, i32) {
    %c0_i32 = arith.constant 0 : i32
    %c0_i32_0 = arith.constant 0 : i32
    %c0_i32_1 = arith.constant 0 : i32
    return %c0_i32, %c0_i32_0 : i32, i32
  }
  func.func @transform_7(%arg0: i32) -> (i32, i32, i32) {
    %c0_i32 = arith.constant 0 : i32
    %c0_i32_0 = arith.constant 0 : i32
    %c0_i32_1 = arith.constant 0 : i32
    return %arg0, %c0_i32, %c0_i32_0 : i32, i32, i32
  }
}

</mosaic_0001>

<llo_original>
// kernel: tpu_custom_call.1
$region0: #{tpu_custom_call.1}
  #allocation0 [shape = 'u32[]', space=smem, size = 0x4, offset = 0x4, fixed_abs, tag = 'smem constant byte address 0x4 - core index']
  #allocation1 [shape = 'u32[72,128]{1,0:T(1,128)}', space=vmem, size = 0x9000, scoped, tag = 'internal scratch']
  %s0 = inlined_call_operand.hbm [shape: bf16[8,32], index: 0, kind: input, shape index: {}]
  %s1 = inlined_call_operand.hbm [shape: f32[2,8,128], index: 1, kind: input, shape index: {}]
  %s2 = inlined_call_operand.hbm [shape: f32[1,2,4,128], index: 2, kind: input, shape index: {}]
  %s3 = inlined_call_operand.hbm [shape: f32[2,256,128], index: 3, kind: input, shape index: {}]
  %s4 = inlined_call_operand.vmem [shape: f32[2,128], index: 4, kind: input, shape index: {}]
  %s5 = inlined_call_operand.vmem [shape: f32[2,128], index: 5, kind: input, shape index: {}]
  %s6 = inlined_call_operand.hbm [shape: f32[2,128], index: 6, kind: input, shape index: {}]
  %s7 = inlined_call_operand.hbm [shape: f32[2,8,128], index: 7, kind: output, shape index: {}]
  %s8 = sld [smem:[#allocation0]]
  $region81: #{tpu_custom_call.1} parent=0
    _
  %s10 = ssub.s32 1, %s8
  %s11 = scalar_select 0, %s10, %s8
  $region1: #{tpu_custom_call.1} parent=0
    #allocation2 [shape = 'u8[2048]{0}', space=vmem, size = 0x800, scoped, tag = 'input window, operand 0, single buffered']
    #allocation3 [shape = 's32[2]{0}', space=sflag, size = 0x8, scoped, tag = 'scoped memory for tpu_custom_call.1']
    #allocation4 [shape = 's32[2]{0}', space=sflag, size = 0x8, scoped, tag = 'scoped memory for tpu_custom_call.1']
    #allocation5 [shape = 'u8[8192]{0}', space=vmem, size = 0x2000, scoped, tag = 'input window, operand 1']
    #allocation6 [shape = 's32[2]{0}', space=sflag, size = 0x8, scoped, tag = 'scoped memory for tpu_custom_call.1']
    #allocation7 [shape = 'u8[4096]{0}', space=vmem, size = 0x1000, scoped, tag = 'input window, operand 2, single buffered']
    #allocation8 [shape = 'u8[262144]{0}', space=vmem, size = 0x40000, scoped, tag = 'input window, operand 3, single buffered']
    #allocation9 [shape = 's32[1]{0}', space=sflag, size = 0x4, scoped, tag = 'scoped memory for tpu_custom_call.1']
    #allocation10 [shape = 'u8[1024]{0}', space=vmem, size = 0x400, scoped, tag = 'input window, operand 6, single buffered']
    #allocation11 [shape = 'u8[8192]{0}', space=vmem, size = 0x2000, scoped, tag = 'output window, operand 0']
    %12 = vsyncpa [#allocation3], 0
    %13 = vsyncpa [#allocation6], 0
    %s14 = scalar_lea.sflag [#allocation6], 1
    %15 = vsyncpa %s14, 0
    %16 = vsyncpa [#allocation9], 0
    %17 = vsyncpa [#allocation4], 0
    %s18 = scalar_lea.sflag [#allocation4], 1
    %19 = vsyncpa %s18, 0
    loop: start=0, step=1, limit=4
    $region2: #{tpu_custom_call.1} parent=1 // loop_pre_header
      _
    $region3: #{tpu_custom_call.1} parent=1 // loop_header
      %s21 = sphi 0, %s25
      %p22 = scmp.ge.s32.totalorder %s21, 4
      %s29 = sphi 0, %s29
      %s31 = sphi 0, %s29
      %s32 = sphi 0, %s31
      %s46 = sphi 0, %s32
      %s52 = sphi 0, %s54
      %s55 = sphi 0, %s52
      %s56 = sphi 0, %s55
      %s72 = sphi 0, %s56
      %s76 = sphi 0, %s76
      %s78 = sphi 0, %s76
      %s79 = sphi 0, %s78
      %s93 = sphi 0, %s79
      %s97 = sphi 0, %s97
      %s99 = sphi 0, %s97
      %s100 = sphi 0, %s99
      %s114 = sphi 0, %s100
      %s118 = sphi 0, %s118
      %s120 = sphi 0, %s118
      %s121 = sphi 0, %s120
      %s135 = sphi 0, %s121
      %s139 = sphi 0, %s139
      %s141 = sphi 0, %s139
      %s142 = sphi 0, %s141
      %s156 = sphi 0, %s142
      %s160 = sphi 0, %s160
      %s162 = sphi 0, %s160
      %s163 = sphi 0, %s162
      %s177 = sphi 0, %s163
      %s183 = sphi 0, %s185
      %s186 = sphi 0, %s183
      %s187 = sphi 0, %s186
      %s203 = sphi 0, %s187
    $region4: #{tpu_custom_call.1} parent=1 // loop_header_branch
      %24 = sbr.rel (%p22) target = $region8
    $region5: #{tpu_custom_call.1} parent=1 // loop_body
      %s26 = ssub.s32 %s21, 1
      %s27 = ssub.s32 %s21, 2
      %s28 = sadd.s32 %s21, 1
      %s30 = sadd.s32 %s29, 1
      %p33 = scmp.eq.s32.totalorder %s21, 1
      %p34 = scmp.ne.s32.totalorder %s29, %s31
      %p35 = scmp.eq.s32.totalorder %s21, 0
      %p36 = por %p34, %p35
      %p37 = scmp.ne.s32.totalorder %s29, %s31
      %p38 = scmp.eq.s32.totalorder %s26, 1
      %p39 = por %p37, %p38
      %p40 = scmp.ne.s32.totalorder %s31, %s32
      %p41 = scmp.eq.s32.totalorder %s26, 0
      %p42 = por %p40, %p41
      %p43 = scmp.ne.s32.totalorder %s31, %s32
      %p44 = scmp.eq.s32.totalorder %s27, 1
      %p45 = por %p43, %p44
      %p47 = scmp.ne.s32.totalorder %s32, %s46
      %p48 = scmp.eq.s32.totalorder %s27, 0
      %p49 = por %p47, %p48
      %s50 = ssub.s32 %s21, %s28
      %p51 = scmp.eq.s32.totalorder %s50, 0
      %s53 = sadd.s32 %s52, 1
      %s54 = scalar_select %p51, %s52, %s53
      %p57 = pneg %p51
      %p58 = scmp.eq.s32.totalorder %s21, 1
      %p59 = por %p57, %p58
      %p60 = scmp.ne.s32.totalorder %s52, %s55
      %p61 = scmp.eq.s32.totalorder %s21, 0
      %p62 = por %p60, %p61
      %p63 = scmp.ne.s32.totalorder %s52, %s55
      %p64 = scmp.eq.s32.totalorder %s26, 1
      %p65 = por %p63, %p64
      %p66 = scmp.ne.s32.totalorder %s55, %s56
      %p67 = scmp.eq.s32.totalorder %s26, 0
      %p68 = por %p66, %p67
      %p69 = scmp.ne.s32.totalorder %s55, %s56
      %p70 = scmp.eq.s32.totalorder %s27, 1
      %p71 = por %p69, %p70
      %p73 = scmp.ne.s32.totalorder %s56, %s72
      %p74 = scmp.eq.s32.totalorder %s27, 0
      %p75 = por %p73, %p74
      %s77 = sadd.s32 %s76, 1
      %p80 = scmp.eq.s32.totalorder %s21, 1
      %p81 = scmp.ne.s32.totalorder %s76, %s78
      %p82 = scmp.eq.s32.totalorder %s21, 0
      %p83 = por %p81, %p82
      %p84 = scmp.ne.s32.totalorder %s76, %s78
      %p85 = scmp.eq.s32.totalorder %s26, 1
      %p86 = por %p84, %p85
      %p87 = scmp.ne.s32.totalorder %s78, %s79
      %p88 = scmp.eq.s32.totalorder %s26, 0
      %p89 = por %p87, %p88
      %p90 = scmp.ne.s32.totalorder %s78, %s79
      %p91 = scmp.eq.s32.totalorder %s27, 1
      %p92 = por %p90, %p91
      %p94 = scmp.ne.s32.totalorder %s79, %s93
      %p95 = scmp.eq.s32.totalorder %s27, 0
      %p96 = por %p94, %p95
      %s98 = sadd.s32 %s97, 1
      %p101 = scmp.eq.s32.totalorder %s21, 1
      %p102 = scmp.ne.s32.totalorder %s97, %s99
      %p103 = scmp.eq.s32.totalorder %s21, 0
      %p104 = por %p102, %p103
      %p105 = scmp.ne.s32.totalorder %s97, %s99
      %p106 = scmp.eq.s32.totalorder %s26, 1
      %p107 = por %p105, %p106
      %p108 = scmp.ne.s32.totalorder %s99, %s100
      %p109 = scmp.eq.s32.totalorder %s26, 0
      %p110 = por %p108, %p109
      %p111 = scmp.ne.s32.totalorder %s99, %s100
      %p112 = scmp.eq.s32.totalorder %s27, 1
      %p113 = por %p111, %p112
      %p115 = scmp.ne.s32.totalorder %s100, %s114
      %p116 = scmp.eq.s32.totalorder %s27, 0
      %p117 = por %p115, %p116
      %s119 = sadd.s32 %s118, 1
      %p122 = scmp.eq.s32.totalorder %s21, 1
      %p123 = scmp.ne.s32.totalorder %s118, %s120
      %p124 = scmp.eq.s32.totalorder %s21, 0
      %p125 = por %p123, %p124
      %p126 = scmp.ne.s32.totalorder %s118, %s120
      %p127 = scmp.eq.s32.totalorder %s26, 1
      %p128 = por %p126, %p127
      %p129 = scmp.ne.s32.totalorder %s120, %s121
      %p130 = scmp.eq.s32.totalorder %s26, 0
      %p131 = por %p129, %p130
      %p132 = scmp.ne.s32.totalorder %s120, %s121
      %p133 = scmp.eq.s32.totalorder %s27, 1
      %p134 = por %p132, %p133
      %p136 = scmp.ne.s32.totalorder %s121, %s135
      %p137 = scmp.eq.s32.totalorder %s27, 0
      %p138 = por %p136, %p137
      %s140 = sadd.s32 %s139, 1
      %p143 = scmp.eq.s32.totalorder %s21, 1
      %p144 = scmp.ne.s32.totalorder %s139, %s141
      %p145 = scmp.eq.s32.totalorder %s21, 0
      %p146 = por %p144, %p145
      %p147 = scmp.ne.s32.totalorder %s139, %s141
      %p148 = scmp.eq.s32.totalorder %s26, 1
      %p149 = por %p147, %p148
      %p150 = scmp.ne.s32.totalorder %s141, %s142
      %p151 = scmp.eq.s32.totalorder %s26, 0
      %p152 = por %p150, %p151
      %p153 = scmp.ne.s32.totalorder %s141, %s142
      %p154 = scmp.eq.s32.totalorder %s27, 1
      %p155 = por %p153, %p154
      %p157 = scmp.ne.s32.totalorder %s142, %s156
      %p158 = scmp.eq.s32.totalorder %s27, 0
      %p159 = por %p157, %p158
      %s161 = sadd.s32 %s160, 1
      %p164 = scmp.eq.s32.totalorder %s21, 1
      %p165 = scmp.ne.s32.totalorder %s160, %s162
      %p166 = scmp.eq.s32.totalorder %s21, 0
      %p167 = por %p165, %p166
      %p168 = scmp.ne.s32.totalorder %s160, %s162
      %p169 = scmp.eq.s32.totalorder %s26, 1
      %p170 = por %p168, %p169
      %p171 = scmp.ne.s32.totalorder %s162, %s163
      %p172 = scmp.eq.s32.totalorder %s26, 0
      %p173 = por %p171, %p172
      %p174 = scmp.ne.s32.totalorder %s162, %s163
      %p175 = scmp.eq.s32.totalorder %s27, 1
      %p176 = por %p174, %p175
      %p178 = scmp.ne.s32.totalorder %s163, %s177
      %p179 = scmp.eq.s32.totalorder %s27, 0
      %p180 = por %p178, %p179
      %s181 = ssub.s32 %s21, %s28
      %p182 = scmp.eq.s32.totalorder %s181, 0
      %s184 = sadd.s32 %s183, 1
      %s185 = scalar_select %p182, %s183, %s184
      %p188 = pneg %p182
      %p189 = scmp.eq.s32.totalorder %s21, 1
      %p190 = por %p188, %p189
      %p191 = scmp.ne.s32.totalorder %s183, %s186
      %p192 = scmp.eq.s32.totalorder %s21, 0
      %p193 = por %p191, %p192
      %p194 = scmp.ne.s32.totalorder %s183, %s186
      %p195 = scmp.eq.s32.totalorder %s26, 1
      %p196 = por %p194, %p195
      %p197 = scmp.ne.s32.totalorder %s186, %s187
      %p198 = scmp.eq.s32.totalorder %s26, 0
      %p199 = por %p197, %p198
      %p200 = scmp.ne.s32.totalorder %s186, %s187
      %p201 = scmp.eq.s32.totalorder %s27, 1
      %p202 = por %p200, %p201
      %p204 = scmp.ne.s32.totalorder %s187, %s203
      %p205 = scmp.eq.s32.totalorder %s27, 0
      %p206 = por %p204, %p205
      %p207 = scmp.le.s32.totalorder 1, %s21
      %p208 = scmp.lt.s32.totalorder %s21, 3
      %p209 = pnand %p207, %p208
      %p210 = pneg %p209
      // Predicated region
      $region9: #{tpu_custom_call.1} parent=5 // pred_check
        _
      $region10: #{tpu_custom_call.1} parent=5 // pred_check_branch
        %212 = sbr.rel (%p209) target = $region12
      $region11: #{tpu_custom_call.1} parent=5 // pred_region
        %s213 = ssub.s32 %s21, 1
        // Predicated region
        $region13: #{tpu_custom_call.1} parent=11 // pred_check
          %p214 = pneg %p42
        $region14: #{tpu_custom_call.1} parent=11 // pred_check_branch
          %216 = sbr.rel (%p214) target = $region16
        $region15: #{tpu_custom_call.1} parent=11 // pred_region
          %218 = vsyncadd [#allocation3], 0
          %s220 = sshll.u32 %s0, 4
          %s221 = int_to_ptr.hbm [resolvable:$true] %s220
          %s222 = sshll.u32 [#allocation2], 4
          %s223 = int_to_ptr.vmem [resolvable:$true] %s222
          %225 = dma.hbm_to_vmem [thread:$0]  %s221, 64, %s223, [#allocation3]
        $region16: #{tpu_custom_call.1} parent=11 // pred_fallthru
          _
        // Predicated region
        $region17: #{tpu_custom_call.1} parent=11 // pred_check
          %p226 = pneg %p89
        $region18: #{tpu_custom_call.1} parent=11 // pred_check_branch
          %228 = sbr.rel (%p226) target = $region20
        $region19: #{tpu_custom_call.1} parent=11 // pred_region
          %230 = vsyncadd [#allocation6], 0
          %s231 = sshll.u32 %s2, 4
          %s232 = int_to_ptr.hbm [resolvable:$true] %s231
          %s233 = sshll.u32 [#allocation7], 4
          %s234 = int_to_ptr.vmem [resolvable:$true] %s233
          %239 = dma.hbm_to_vmem [thread:$0]  %s232, 128, %s234, [#allocation6], 64, 64, 4
        $region20: #{tpu_custom_call.1} parent=11 // pred_fallthru
          _
        // Predicated region
        $region21: #{tpu_custom_call.1} parent=11 // pred_check
          %p240 = pneg %p110
        $region22: #{tpu_custom_call.1} parent=11 // pred_check_branch
          %242 = sbr.rel (%p240) target = $region24
        $region23: #{tpu_custom_call.1} parent=11 // pred_region
          %244 = vsyncadd [#allocation9], 0
          %s245 = sshll.u32 %s3, 4
          %s246 = int_to_ptr.hbm [resolvable:$true] %s245
          %s247 = sshll.u32 [#allocation8], 4
          %s248 = int_to_ptr.vmem [resolvable:$true] %s247
          %253 = dma.hbm_to_vmem [thread:$0]  %s246, 8192, %s248, [#allocation9], 128, 128, 8
        $region24: #{tpu_custom_call.1} parent=11 // pred_fallthru
          _
        // Predicated region
        $region25: #{tpu_custom_call.1} parent=11 // pred_check
          %p254 = pneg %p131
        $region26: #{tpu_custom_call.1} parent=11 // pred_check_branch
          %256 = sbr.rel (%p254) target = $region28
        $region27: #{tpu_custom_call.1} parent=11 // pred_region
          _
        $region28: #{tpu_custom_call.1} parent=11 // pred_fallthru
          _
        // Predicated region
        $region29: #{tpu_custom_call.1} parent=11 // pred_check
          %p257 = pneg %p152
        $region30: #{tpu_custom_call.1} parent=11 // pred_check_branch
          %259 = sbr.rel (%p257) target = $region32
        $region31: #{tpu_custom_call.1} parent=11 // pred_region
          _
        $region32: #{tpu_custom_call.1} parent=11 // pred_fallthru
          _
        // Predicated region
        $region33: #{tpu_custom_call.1} parent=11 // pred_check
          %p260 = pneg %p173
        $region34: #{tpu_custom_call.1} parent=11 // pred_check_branch
          %262 = sbr.rel (%p260) target = $region36
        $region35: #{tpu_custom_call.1} parent=11 // pred_region
          %264 = vsyncadd [#allocation9], 0
          %s266 = sshll.u32 %s6, 4
          %s267 = int_to_ptr.hbm [resolvable:$true] %s266
          %s268 = sshll.u32 [#allocation10], 4
          %s269 = int_to_ptr.vmem [resolvable:$true] %s268
          %271 = dma.hbm_to_vmem [thread:$0]  %s267, 32, %s269, [#allocation9]
        $region36: #{tpu_custom_call.1} parent=11 // pred_fallthru
          _
      $region12: #{tpu_custom_call.1} parent=5 // pred_fallthru
        _
      %p272 = scmp.lt.s32.totalorder %s21, 2
      // Predicated region
      $region37: #{tpu_custom_call.1} parent=5 // pred_check
        %p273 = pneg %p272
      $region38: #{tpu_custom_call.1} parent=5 // pred_check_branch
        %275 = sbr.rel (%p273) target = $region40
      $region39: #{tpu_custom_call.1} parent=5 // pred_region
        // Predicated region
        $region41: #{tpu_custom_call.1} parent=39 // pred_check
          %p276 = pneg %p62
        $region42: #{tpu_custom_call.1} parent=39 // pred_check_branch
          %278 = sbr.rel (%p276) target = $region44
        $region43: #{tpu_custom_call.1} parent=39 // pred_region
          %s279 = sand.u32 %s21, 1
          %s280 = scalar_lea.sflag [#allocation6], %s279
          %s281 = sand.u32 %s52, 1
          %s282 = smul.addr %s281, 8
          %s283 = scalar_lea.vmem [#allocation5], %s282
          %285 = vsyncadd %s280, 0
          %s286 = smul.addr %s21, 8
          %s287 = scalar_lea.hbm %s1, %s286
          %s289 = sshll.u32 %s287, 4
          %s290 = int_to_ptr.hbm [resolvable:$true] %s289
          %s291 = sshll.u32 %s283, 4
          %s292 = int_to_ptr.vmem [resolvable:$true] %s291
          %294 = dma.hbm_to_vmem [thread:$0]  %s290, 128, %s292, %s280
        $region44: #{tpu_custom_call.1} parent=39 // pred_fallthru
          _
      $region40: #{tpu_custom_call.1} parent=5 // pred_fallthru
        _
      %p295 = scmp.le.s32.totalorder 1, %s21
      %p296 = scmp.lt.s32.totalorder %s21, 3
      %p297 = pnand %p295, %p296
      %p298 = pneg %p297
      // Predicated region
      $region45: #{tpu_custom_call.1} parent=5 // pred_check
        _
      $region46: #{tpu_custom_call.1} parent=5 // pred_check_branch
        %300 = sbr.rel (%p297) target = $region48
      $region47: #{tpu_custom_call.1} parent=5 // pred_region
        %s301 = ssub.s32 %s21, 1
        // Predicated region
        $region49: #{tpu_custom_call.1} parent=47 // pred_check
          %p302 = pneg %p42
        $region50: #{tpu_custom_call.1} parent=47 // pred_check_branch
          %304 = sbr.rel (%p302) target = $region52
        $region51: #{tpu_custom_call.1} parent=47 // pred_region
          %306 = dma.done [#allocation3], 64
        $region52: #{tpu_custom_call.1} parent=47 // pred_fallthru
          _
        %s307 = sand.u32 %s26, 1
        %s308 = scalar_lea.sflag [#allocation6], %s307
        %s309 = sand.u32 %s55, 1
        %s310 = smul.addr %s309, 8
        %s311 = scalar_lea.vmem [#allocation5], %s310
        // Predicated region
        $region53: #{tpu_custom_call.1} parent=47 // pred_check
          %p312 = pneg %p68
        $region54: #{tpu_custom_call.1} parent=47 // pred_check_branch
          %314 = sbr.rel (%p312) target = $region56
        $region55: #{tpu_custom_call.1} parent=47 // pred_region
          %316 = dma.done %s308, 128
        $region56: #{tpu_custom_call.1} parent=47 // pred_fallthru
          _
        // Predicated region
        $region57: #{tpu_custom_call.1} parent=47 // pred_check
          %p317 = pneg %p89
        $region58: #{tpu_custom_call.1} parent=47 // pred_check_branch
          %319 = sbr.rel (%p317) target = $region60
        $region59: #{tpu_custom_call.1} parent=47 // pred_region
          %321 = dma.done [#allocation6], 128
        $region60: #{tpu_custom_call.1} parent=47 // pred_fallthru
          _
        // Predicated region
        $region61: #{tpu_custom_call.1} parent=47 // pred_check
          %p322 = pneg %p110
        $region62: #{tpu_custom_call.1} parent=47 // pred_check_branch
          %324 = sbr.rel (%p322) target = $region64
        $region63: #{tpu_custom_call.1} parent=47 // pred_region
          %326 = dma.done [#allocation9], 8192
        $region64: #{tpu_custom_call.1} parent=47 // pred_fallthru
          _
        // Predicated region
        $region65: #{tpu_custom_call.1} parent=47 // pred_check
          %p327 = pneg %p173
        $region66: #{tpu_custom_call.1} parent=47 // pred_check_branch
          %329 = sbr.rel (%p327) target = $region68
        $region67: #{tpu_custom_call.1} parent=47 // pred_region
          %331 = dma.done [#allocation9], 32
        $region68: #{tpu_custom_call.1} parent=47 // pred_fallthru
          _
        %p332 = pneg %p42
        %p333 = pneg %p39
        %s334 = sand.u32 %s26, 1
        %s335 = scalar_lea.sflag [#allocation6], %s334
        %s336 = sand.u32 %s55, 1
        %s337 = smul.addr %s336, 8
        %s338 = scalar_lea.vmem [#allocation5], %s337
        %p339 = pneg %p68
        %p340 = pneg %p65
        %p341 = pneg %p89
        %p342 = pneg %p86
        %p343 = pneg %p110
        %p344 = pneg %p107
        %p345 = pneg %p131
        %p346 = pneg %p128
        %p347 = pneg %p152
        %p348 = pneg %p149
        %p349 = pneg %p173
        %p350 = pneg %p170
        %p351 = pneg %p199
        %p352 = pneg %p196
        %s353 = sand.u32 %s186, 1
        %s354 = scalar_lea.sflag [#allocation4], %s353
        %s355 = sand.u32 %s186, 1
        %s356 = smul.addr %s355, 8
        %s357 = scalar_lea.vmem [#allocation11], %s356
        %v359 = vld [vmem:[#allocation2] sm:$0xf]
        %v360 = vld [vmem:[%s311] sm:$0xff]
        %v361 = vld [vmem:[#allocation7] sm:$0xf]
        %v363 = vrot.slane %v361, 1
        %v364 = vrot.slane %v361, 2
        %v365 = vrot.slane %v361, 3
        %v366 = vperm.slane %v361, 0
        %v367 = vperm.slane %v363, 0
        %v368 = vperm.slane %v364, 0
        %v369 = vperm.slane %v365, 0
        %v374 = vmul.f32 %v366, %v360
        %v375 = vmul.f32 %v367, %v360
        %v376 = vmul.f32 %v368, %v360
        %v377 = vmul.f32 %v369, %v360
        %v378 = vpack.c.bf16 %v375, %v374
        %v379 = vpack.c.bf16 %v377, %v376
        %vm380 = vcmask 261120
        %v382 = vsel %vm380, %v359, 0
        %384 = vmatpush.bf16.msra.mxu0 0
        %385 = vmatpush.bf16.msra.mxu0 0
        %386 = vmatpush.bf16.msra.mxu0 0
        %387 = vmatpush.bf16.msra.mxu0 0
        %388 = vmatpush.bf16.msra.mxu0 0
        %389 = vmatpush.bf16.msra.mxu0 0
        %390 = vmatpush.bf16.msra.mxu0 %v379
        %391 = vmatpush.bf16.msra.mxu0 %v378
        %392 = vmatmul.bf16.gmra.mxu0 %v382
        %v393 = vpop.f32.mrf.mxu0
        %v394 = vadd.f32 0.0, %v393
        %v395 = vpop.f32.mrf.mxu0
        %396 = vdwg.mxu0
        %v397 = vadd.f32 %v360, %v394
        %v398 = vld [vmem:[#allocation8] sm:$0xff]
        %v399 = vld [vmem:[#allocation8 + $0x8] sm:$0xff]
        %v400 = vld [vmem:[#allocation8 + $0x10] sm:$0xff]
        %v401 = vld [vmem:[#allocation8 + $0x18] sm:$0xff]
        %v402 = vld [vmem:[#allocation8 + $0x20] sm:$0xff]
        %v403 = vld [vmem:[#allocation8 + $0x28] sm:$0xff]
        %v404 = vld [vmem:[#allocation8 + $0x30] sm:$0xff]
        %v405 = vld [vmem:[#allocation8 + $0x38] sm:$0xff]
        %v406 = vld [vmem:[#allocation8 + $0x40] sm:$0xff]
        %v407 = vld [vmem:[#allocation8 + $0x48] sm:$0xff]
        %v408 = vld [vmem:[#allocation8 + $0x50] sm:$0xff]
        %v409 = vld [vmem:[#allocation8 + $0x58] sm:$0xff]
        %v410 = vld [vmem:[#allocation8 + $0x60] sm:$0xff]
        %v411 = vld [vmem:[#allocation8 + $0x68] sm:$0xff]
        %v412 = vld [vmem:[#allocation8 + $0x70] sm:$0xff]
        %v413 = vld [vmem:[#allocation8 + $0x78] sm:$0xff]
        %v414 = vld [vmem:[#allocation8 + $0x80] sm:$0xff]
        %v415 = vld [vmem:[#allocation8 + $0x88] sm:$0xff]
        %v416 = vld [vmem:[#allocation8 + $0x90] sm:$0xff]
        %v417 = vld [vmem:[#allocation8 + $0x98] sm:$0xff]
        %v418 = vld [vmem:[#allocation8 + $0xa0] sm:$0xff]
        %v419 = vld [vmem:[#allocation8 + $0xa8] sm:$0xff]
        %v420 = vld [vmem:[#allocation8 + $0xb0] sm:$0xff]
        %v421 = vld [vmem:[#allocation8 + $0xb8] sm:$0xff]
        %v422 = vld [vmem:[#allocation8 + $0xc0] sm:$0xff]
        %v423 = vld [vmem:[#allocation8 + $0xc8] sm:$0xff]
        %v424 = vld [vmem:[#allocation8 + $0xd0] sm:$0xff]
        %v425 = vld [vmem:[#allocation8 + $0xd8] sm:$0xff]
        %v426 = vld [vmem:[#allocation8 + $0xe0] sm:$0xff]
        %v427 = vld [vmem:[#allocation8 + $0xe8] sm:$0xff]
        %v428 = vld [vmem:[#allocation8 + $0xf0] sm:$0xff]
        %v429 = vld [vmem:[#allocation8 + $0xf8] sm:$0xff]
        %430 = vmatpush.msra.mxu0 %v429
        %431 = vmatpush.msra.mxu0 %v428
        %432 = vmatpush.msra.mxu0 %v427
        %433 = vmatpush.msra.mxu0 %v426
        %434 = vmatpush.msra.mxu0 %v425
        %435 = vmatpush.msra.mxu0 %v424
        %436 = vmatpush.msra.mxu0 %v423
        %437 = vmatpush.msra.mxu0 %v422
        %438 = vmatpush.msra.mxu0 %v421
        %439 = vmatpush.msra.mxu0 %v420
        %440 = vmatpush.msra.mxu0 %v419
        %441 = vmatpush.msra.mxu0 %v418
        %442 = vmatpush.msra.mxu0 %v417
        %443 = vmatpush.msra.mxu0 %v416
        %444 = vmatpush.msra.mxu0 %v415
        %445 = vmatpush.msra.mxu0 %v414
        %446 = vmatmul.f32.gmra.mxu0 %v397
        %v447 = vpop.f32.mrf.mxu0
        %v448 = vadd.f32 0.0, %v447
        %449 = vdwg.mxu0
        %450 = vmatpush.msra.mxu0 %v413
        %451 = vmatpush.msra.mxu0 %v412
        %452 = vmatpush.msra.mxu0 %v411
        %453 = vmatpush.msra.mxu0 %v410
        %454 = vmatpush.msra.mxu0 %v409
        %455 = vmatpush.msra.mxu0 %v408
        %456 = vmatpush.msra.mxu0 %v407
        %457 = vmatpush.msra.mxu0 %v406
        %458 = vmatpush.msra.mxu0 %v405
        %459 = vmatpush.msra.mxu0 %v404
        %460 = vmatpush.msra.mxu0 %v403
        %461 = vmatpush.msra.mxu0 %v402
        %462 = vmatpush.msra.mxu0 %v401
        %463 = vmatpush.msra.mxu0 %v400
        %464 = vmatpush.msra.mxu0 %v399
        %465 = vmatpush.msra.mxu0 %v398
        %466 = vmatmul.f32.gmra.mxu0 %v360
        %v467 = vpop.f32.mrf.mxu0
        %v468 = vadd.f32 %v448, %v467
        %469 = vdwg.mxu0
        %v470 = vld [vmem:[%s4] sm:$0x1]
        %v471 = vperm.slane %v470, 0
        %v472 = vadd.f32 %v468, %v471
        %473 = vadd.xlane.f32.xlu0 %v472
        %v474 = vpop.xlane.xlu0 %473
        %v475 = vrcp.pop 128.0
        %v476 = vmul.f32 128.0, %v475
        %v477 = vsub.f32 1.0, %v476
        %v478 = vmul.f32 %v475, %v477
        %v479 = vadd.f32 %v475, %v478
        %vm480 = vweird.f32 %v475
        %v481 = vsel %vm480, %v475, %v479
        %v482 = vmul.f32 %v474, %v481
        %v483 = vsub.f32 %v472, %v482
        %v484 = vmul.f32 %v483, %v483
        %485 = vadd.xlane.f32.xlu0 %v484
        %v486 = vpop.xlane.xlu0 %485
        %v487 = vmul.f32 %v486, %v481
        %v488 = vadd.f32 %v487, 1e-05
        %v489 = vrsqrt.pop %v488
        %v490 = vmul.f32 %v489, %v488
        %v491 = vmul.f32 %v490, %v489
        %v492 = vmul.f32 0.5, %v491
        %v493 = vsub.f32 1.5, %v492
        %v494 = vmul.f32 %v489, %v493
        %vm495 = vweird.f32 %v488
        %vm496 = vweird.f32 %v489
        %vm497 = vmor %vm495, %vm496
        %v498 = vsel %vm497, %v489, %v494
        %v499 = vmul.f32 %v483, %v498
        %v500 = vld [vmem:[%s5] sm:$0x1]
        %v501 = vperm.slane %v500, 0
        %v502 = vmul.f32 %v499, %v501
        %v503 = vld [vmem:[#allocation10] sm:$0x1]
        %v504 = vperm.slane %v503, 0
        %v505 = vadd.f32 %v502, %v504
        %v506 = vmax.f32 %v505, 0.0
        %v507 = vadd.f32 %v506, %v360
        %s508 = scalar_lea.vmem [#allocation7], 4
        %v509 = vld [vmem:[%s508] sm:$0xf]
        %v511 = vrot.slane %v509, 1
        %v512 = vrot.slane %v509, 2
        %v513 = vrot.slane %v509, 3
        %v514 = vperm.slane %v509, 0
        %v515 = vperm.slane %v511, 0
        %v516 = vperm.slane %v512, 0
        %v517 = vperm.slane %v513, 0
        %v522 = vmul.f32 %v514, %v507
        %v523 = vmul.f32 %v515, %v507
        %v524 = vmul.f32 %v516, %v507
        %v525 = vmul.f32 %v517, %v507
        %v526 = vpack.c.bf16 %v523, %v522
        %v527 = vpack.c.bf16 %v525, %v524
        %528 = vmatpush.bf16.msra.mxu0 0
        %529 = vmatpush.bf16.msra.mxu0 0
        %530 = vmatpush.bf16.msra.mxu0 0
        %531 = vmatpush.bf16.msra.mxu0 0
        %532 = vmatpush.bf16.msra.mxu0 0
        %533 = vmatpush.bf16.msra.mxu0 0
        %534 = vmatpush.bf16.msra.mxu0 %v527
        %535 = vmatpush.bf16.msra.mxu0 %v526
        %536 = vmatmul.bf16.gmra.mxu0 %v382
        %v537 = vpop.f32.mrf.mxu0
        %v538 = vadd.f32 0.0, %v537
        %v539 = vpop.f32.mrf.mxu0
        %540 = vdwg.mxu0
        %v541 = vadd.f32 %v360, %v538
        %s542 = scalar_lea.vmem [#allocation8], 256
        %v543 = vld [vmem:[%s542] sm:$0xff]
        %v544 = vld [vmem:[%s542 + $0x8] sm:$0xff]
        %v545 = vld [vmem:[%s542 + $0x10] sm:$0xff]
        %v546 = vld [vmem:[%s542 + $0x18] sm:$0xff]
        %v547 = vld [vmem:[%s542 + $0x20] sm:$0xff]
        %v548 = vld [vmem:[%s542 + $0x28] sm:$0xff]
        %v549 = vld [vmem:[%s542 + $0x30] sm:$0xff]
        %v550 = vld [vmem:[%s542 + $0x38] sm:$0xff]
        %v551 = vld [vmem:[%s542 + $0x40] sm:$0xff]
        %v552 = vld [vmem:[%s542 + $0x48] sm:$0xff]
        %v553 = vld [vmem:[%s542 + $0x50] sm:$0xff]
        %v554 = vld [vmem:[%s542 + $0x58] sm:$0xff]
        %v555 = vld [vmem:[%s542 + $0x60] sm:$0xff]
        %v556 = vld [vmem:[%s542 + $0x68] sm:$0xff]
        %v557 = vld [vmem:[%s542 + $0x70] sm:$0xff]
        %v558 = vld [vmem:[%s542 + $0x78] sm:$0xff]
        %v559 = vld [vmem:[%s542 + $0x80] sm:$0xff]
        %v560 = vld [vmem:[%s542 + $0x88] sm:$0xff]
        %v561 = vld [vmem:[%s542 + $0x90] sm:$0xff]
        %v562 = vld [vmem:[%s542 + $0x98] sm:$0xff]
        %v563 = vld [vmem:[%s542 + $0xa0] sm:$0xff]
        %v564 = vld [vmem:[%s542 + $0xa8] sm:$0xff]
        %v565 = vld [vmem:[%s542 + $0xb0] sm:$0xff]
        %v566 = vld [vmem:[%s542 + $0xb8] sm:$0xff]
        %v567 = vld [vmem:[%s542 + $0xc0] sm:$0xff]
        %v568 = vld [vmem:[%s542 + $0xc8] sm:$0xff]
        %v569 = vld [vmem:[%s542 + $0xd0] sm:$0xff]
        %v570 = vld [vmem:[%s542 + $0xd8] sm:$0xff]
        %v571 = vld [vmem:[%s542 + $0xe0] sm:$0xff]
        %v572 = vld [vmem:[%s542 + $0xe8] sm:$0xff]
        %v573 = vld [vmem:[%s542 + $0xf0] sm:$0xff]
        %v574 = vld [vmem:[%s542 + $0xf8] sm:$0xff]
        %575 = vmatpush.msra.mxu0 %v574
        %576 = vmatpush.msra.mxu0 %v573
        %577 = vmatpush.msra.mxu0 %v572
        %578 = vmatpush.msra.mxu0 %v571
        %579 = vmatpush.msra.mxu0 %v570
        %580 = vmatpush.msra.mxu0 %v569
        %581 = vmatpush.msra.mxu0 %v568
        %582 = vmatpush.msra.mxu0 %v567
        %583 = vmatpush.msra.mxu0 %v566
        %584 = vmatpush.msra.mxu0 %v565
        %585 = vmatpush.msra.mxu0 %v564
        %586 = vmatpush.msra.mxu0 %v563
        %587 = vmatpush.msra.mxu0 %v562
        %588 = vmatpush.msra.mxu0 %v561
        %589 = vmatpush.msra.mxu0 %v560
        %590 = vmatpush.msra.mxu0 %v559
        %591 = vmatmul.f32.gmra.mxu0 %v541
        %v592 = vpop.f32.mrf.mxu0
        %v593 = vadd.f32 0.0, %v592
        %594 = vdwg.mxu0
        %595 = vmatpush.msra.mxu0 %v558
        %596 = vmatpush.msra.mxu0 %v557
        %597 = vmatpush.msra.mxu0 %v556
        %598 = vmatpush.msra.mxu0 %v555
        %599 = vmatpush.msra.mxu0 %v554
        %600 = vmatpush.msra.mxu0 %v553
        %601 = vmatpush.msra.mxu0 %v552
        %602 = vmatpush.msra.mxu0 %v551
        %603 = vmatpush.msra.mxu0 %v550
        %604 = vmatpush.msra.mxu0 %v549
        %605 = vmatpush.msra.mxu0 %v548
        %606 = vmatpush.msra.mxu0 %v547
        %607 = vmatpush.msra.mxu0 %v546
        %608 = vmatpush.msra.mxu0 %v545
        %609 = vmatpush.msra.mxu0 %v544
        %610 = vmatpush.msra.mxu0 %v543
        %611 = vmatmul.f32.gmra.mxu0 %v507
        %v612 = vpop.f32.mrf.mxu0
        %v613 = vadd.f32 %v593, %v612
        %614 = vdwg.mxu0
        %v615 = vld [vmem:[%s4 + $0x1] sm:$0x1]
        %v616 = vperm.slane %v615, 0
        %v617 = vadd.f32 %v613, %v616
        %618 = vadd.xlane.f32.xlu0 %v617
        %v619 = vpop.xlane.xlu0 %618
        %v620 = vmul.f32 %v619, %v481
        %v621 = vsub.f32 %v617, %v620
        %v622 = vmul.f32 %v621, %v621
        %623 = vadd.xlane.f32.xlu0 %v622
        %v624 = vpop.xlane.xlu0 %623
        %v625 = vmul.f32 %v624, %v481
        %v626 = vadd.f32 %v625, 1e-05
        %v627 = vrsqrt.pop %v626
        %v628 = vmul.f32 %v627, %v626
        %v629 = vmul.f32 %v628, %v627
        %v630 = vmul.f32 0.5, %v629
        %v631 = vsub.f32 1.5, %v630
        %v632 = vmul.f32 %v627, %v631
        %vm633 = vweird.f32 %v626
        %vm634 = vweird.f32 %v627
        %vm635 = vmor %vm633, %vm634
        %v636 = vsel %vm635, %v627, %v632
        %v637 = vmul.f32 %v621, %v636
        %v638 = vld [vmem:[%s5 + $0x1] sm:$0x1]
        %v639 = vperm.slane %v638, 0
        %v640 = vmul.f32 %v637, %v639
        %v641 = vld [vmem:[#allocation10 + $0x1] sm:$0x1]
        %v642 = vperm.slane %v641, 0
        %v643 = vadd.f32 %v640, %v642
        %v644 = vmax.f32 %v643, 0.0
        %v645 = vadd.f32 %v644, %v507
        %646 = vst [vmem:[%s357] sm:$0xff] %v645
        %s647 = sand.u32 %s186, 1
        %s648 = scalar_lea.sflag [#allocation4], %s647
        %s649 = sand.u32 %s186, 1
        %s650 = smul.addr %s649, 8
        %s651 = scalar_lea.vmem [#allocation11], %s650
        // Predicated region
        $region69: #{tpu_custom_call.1} parent=47 // pred_check
          %p652 = pneg %p196
        $region70: #{tpu_custom_call.1} parent=47 // pred_check_branch
          %654 = sbr.rel (%p652) target = $region72
        $region71: #{tpu_custom_call.1} parent=47 // pred_region
          %656 = vsyncadd %s648, 0
          %s657 = smul.addr %s26, 8
          %s658 = scalar_lea.hbm %s7, %s657
          %s660 = sshll.u32 %s651, 4
          %s661 = int_to_ptr.vmem [resolvable:$true] %s660
          %s662 = sshll.u32 %s658, 4
          %s663 = int_to_ptr.hbm [resolvable:$true] %s662
          %665 = dma.vmem_to_hbm [thread:$0]  %s661, 128, %s663, %s648
        $region72: #{tpu_custom_call.1} parent=47 // pred_fallthru
          _
      $region48: #{tpu_custom_call.1} parent=5 // pred_fallthru
        _
      %p666 = scmp.le.s32.totalorder 2, %s21
      // Predicated region
      $region73: #{tpu_custom_call.1} parent=5 // pred_check
        %p667 = pneg %p666
      $region74: #{tpu_custom_call.1} parent=5 // pred_check_branch
        %669 = sbr.rel (%p667) target = $region76
      $region75: #{tpu_custom_call.1} parent=5 // pred_region
        %s670 = ssub.s32 %s21, 2
        // Predicated region
        $region77: #{tpu_custom_call.1} parent=75 // pred_check
          %p671 = pneg %p202
        $region78: #{tpu_custom_call.1} parent=75 // pred_check_branch
          %673 = sbr.rel (%p671) target = $region80
        $region79: #{tpu_custom_call.1} parent=75 // pred_region
          %s674 = sand.u32 %s187, 1
          %s675 = scalar_lea.sflag [#allocation4], %s674
          %s676 = sand.u32 %s187, 1
          %s677 = smul.addr %s676, 8
          %s678 = scalar_lea.vmem [#allocation11], %s677
          %680 = dma.done %s675, 128
        $region80: #{tpu_custom_call.1} parent=75 // pred_fallthru
          _
      $region76: #{tpu_custom_call.1} parent=5 // pred_fallthru
        _
    $region6: #{tpu_custom_call.1} parent=1 // loop_footer
      %s25 = sadd.s32 1, %s21
    $region7: #{tpu_custom_call.1} parent=1 // loop_footer_branch
      %20 = sbr.rel target = $region3
    $region8: #{tpu_custom_call.1} parent=1 // loop_exit
      _
    %681 = vsyncpa [#allocation3], 1
    %s682 = scalar_lea.sflag [#allocation3], 1
    %683 = vsyncpa %s682, 1
    %684 = vsyncpa [#allocation6], 1
    %s685 = scalar_lea.sflag [#allocation6], 1
    %686 = vsyncpa %s685, 1
    %687 = vsyncpa [#allocation9], 1
    %688 = vsyncpa [#allocation4], 1
    %s689 = scalar_lea.sflag [#allocation4], 1
    %690 = vsyncpa %s689, 1

</llo_original>
